<compile_context>
chip_gen: v7x
topology: tpu7x:2x2x1
jax: 0.10.0
libtpu: 0.0.40
codegen_flags: <defaults>
</compile_context>

<pallas_src>
import functools

import jax
import jax.numpy as jnp
from jax import lax
from jax.experimental import pallas as pl
from jax.experimental.pallas import tpu as pltpu


def _csra_kernel(lam_ref, x_ref, w_ref, o_ref, *, bt, hw):
    # lam_ref: (1,)   f32 SMEM        x_ref: (bt, C, HW) bf16 VMEM
    # w_ref:   (K, C) bf16 VMEM       o_ref: (bt, K, C)  f32  VMEM
    lam = lam_ref[0]
    w = w_ref[...]
    inv_hw = jnp.float32(1.0 / hw)

    # bt is a small compile-time constant (<= 8 by default) -> bounded unroll.
    for b in range(bt):
        xb = x_ref[b]                                                  # (C, HW) bf16 view
        # 1x1 conv over this image: one lane-dense MXU matmul, f32 accumulation.
        logits = jnp.dot(w, xb, preferred_element_type=jnp.float32)   # (K, HW) f32
        # Spatial softmax in f32; denominator on the EUP (approx reciprocal, free slot).
        m = jnp.max(logits, axis=-1, keepdims=True)
        e = jnp.exp(logits - m)                                        # (K, HW) f32
        inv_den = pl.reciprocal(jnp.sum(e, axis=-1, keepdims=True), approx=True)
        # lamda * attention, contracted over HW, result already oriented (K, C):
        #   att[k, c] = lam * sum_s softmax(logits)[k, s] * x[c, s]
        w_att = (lam * inv_den) * e                                    # (K, HW) f32
        att = lax.dot_general(
            w_att.astype(xb.dtype), xb,
            (((1,), (1,)), ((), ())),
            preferred_element_type=jnp.float32)                        # (K, C) f32
        # Global average pool in f32 on the VPU (kept out of the bf16 MXU fold).
        gap = jnp.sum(xb.astype(jnp.float32), axis=-1) * inv_hw        # (C,) f32
        o_ref[b] = (att + gap[None, :]).astype(o_ref.dtype)


def _pick_block_b(B, C, HW, itemsize):
    """Images fused per grid step: a divisor of B (so no batch-padding copy), capped
    by a VMEM budget, by 8 (bounded unroll), and so the grid keeps >= 2 parallel
    steps whenever B >= 2 (both v7x TensorCores get work)."""
    budget = 12 * 1024 * 1024                    # per x block (Pallas double-buffers it)
    per_image = max(1, C * HW * itemsize)
    cap = max(1, min(budget // per_image, 8, B // 2 if B >= 2 else 1))
    bt = 1
    for d in range(1, int(cap) + 1):
        if B % d == 0:
            bt = d
    return int(bt)


def residual_attention_neck(x_nchw, fc_weight, lamda, *, block_b=None,
                            compute_dtype=jnp.bfloat16):
    """x_nchw: (B, C, H, W); fc_weight: (K, C, 1, 1) torch Conv2d weight layout.

    Returns (B, K, C) float32.  Like the torch module (hardcoded `.repeat(1, 1, 12)`),
    the gap broadcast is only faithful when K == 12.
    """
    if isinstance(x_nchw, (tuple, list)):
        x_nchw = x_nchw[-1]
    B, C, H, W = x_nchw.shape
    K = fc_weight.shape[0]
    HW = H * W

    itemsize = jnp.dtype(compute_dtype).itemsize
    bt = int(block_b) if block_b is not None else _pick_block_b(B, C, HW, itemsize)
    nb = int(pl.cdiv(B, bt))
    b_pad = nb * bt

    # No host-side layout pass: reshape is free (contiguous), single cast to bf16.
    x = x_nchw.reshape(B, C, HW).astype(compute_dtype)             # (B, C, HW)
    if b_pad != B:                                                 # only for user block_b
        x = jnp.pad(x, ((0, b_pad - B), (0, 0), (0, 0)))
    w = fc_weight.reshape(K, C).astype(compute_dtype)              # (K, C)
    lam = jnp.asarray([lamda], dtype=jnp.float32)                  # runtime SMEM scalar

    kernel = functools.partial(_csra_kernel, bt=bt, hw=HW)

    # VMEM budget from the actual block sizes (double-buffered), capped under v7x 64 MiB.
    x_blk = bt * C * HW * itemsize
    o_blk = bt * K * C * 4
    w_blk = K * C * itemsize
    vmem_limit = int(min(64 * 2**20,
                         max(16 * 2**20,
                             2 * x_blk + 2 * o_blk + 2 * w_blk + 4 * 2**20)))

    cost = pl.CostEstimate(
        flops=int(4 * b_pad * K * C * HW + b_pad * C * HW),
        transcendentals=int(b_pad * K * HW),
        bytes_accessed=int(b_pad * C * HW * itemsize + K * C * itemsize
                           + b_pad * K * C * 4),
    )

    out = pl.pallas_call(
        kernel,
        out_shape=jax.ShapeDtypeStruct((b_pad, K, C), jnp.float32),
        grid_spec=pltpu.PrefetchScalarGridSpec(
            num_scalar_prefetch=0,
            grid=(nb,),
            in_specs=[
                pl.BlockSpec(memory_space=pltpu.MemorySpace.SMEM),   # lamda
                pl.BlockSpec((bt, C, HW), lambda g: (g, 0, 0)),      # x block
                pl.BlockSpec((K, C), lambda g: (0, 0)),              # conv weight
            ],
            out_specs=pl.BlockSpec((bt, K, C), lambda g: (g, 0, 0)),
        ),
        compiler_params=pltpu.CompilerParams(
            dimension_semantics=("parallel",),
            vmem_limit_bytes=vmem_limit,
        ),
        cost_estimate=cost,
    )(lam, x, w)

    return out[:B]


def _reference(x_nchw, fc_weight, lamda):
    """Pure-JAX (f32) transcription of the PyTorch forward, for verification."""
    B, C, H, W = x_nchw.shape
    K = fc_weight.shape[0]
    x = x_nchw.astype(jnp.float32)
    gap = jnp.mean(x, axis=(2, 3))                                  # (B, C)
    gap = jnp.repeat(gap[:, :, None], 12, axis=2)                   # (B, C, 12)
    w = fc_weight.reshape(K, C).astype(jnp.float32)
    outs = jnp.einsum("kc,bchw->bkhw", w, x).reshape(B, K, H * W)   # (B, K, HW)
    attn = jax.nn.softmax(outs, axis=-1).transpose(0, 2, 1)         # (B, HW, K)
    xin = x.reshape(B, C, H * W)
    att = jnp.matmul(xin, attn)                                     # (B, C, K)
    return (gap + lamda * att).transpose(0, 2, 1)                   # (B, K, C)


if __name__ == "__main__":
    # Small deterministic shapes: B=2, C=32, H=W=16, num_classes=12 (fixed by the
    # hardcoded `.repeat(1, 1, 12)` in the torch module), lamda=0.2.
    B, C, H, W, K = 2, 32, 16, 16, 12
    lamda = 0.2

    key = jax.random.PRNGKey(0)
    kx, kw = jax.random.split(key)
    x = jax.random.normal(kx, (B, C, H, W), dtype=jnp.float32)
    fc_weight = jax.random.normal(kw, (K, C, 1, 1), dtype=jnp.float32) * 0.05

    out = residual_attention_neck(x, fc_weight, lamda)
    out = jax.block_until_ready(out)

    ref = _reference(x, fc_weight, lamda)
    assert out.shape == (B, K, C), out.shape
    # bf16 MXU inputs (f32 accumulate, f32 softmax, f32 GAP) -> bf16-level tolerance.
    assert jnp.allclose(out, ref, atol=2e-2, rtol=2e-2), float(jnp.max(jnp.abs(out - ref)))

    print("KERNEL_OK")
</pallas_src>

<mosaic_0001>
module attributes {stable_mosaic.version = 11 : i64} {
  func.func @_csra_kernel(%arg0: i32, %arg1: memref<1xf32, #tpu.memory_space<smem>>, %arg2: memref<1x32x256xbf16, #tpu.memory_space<vmem>>, %arg3: memref<12x32xbf16, #tpu.memory_space<vmem>>, %arg4: memref<1x12x32xf32, #tpu.memory_space<vmem>>) attributes {dimension_semantics = [#tpu.dimension_semantics<parallel>], iteration_bounds = array<i64: 2>, scalar_prefetch = 0 : i64, scratch_operands = 0 : i64, tpu.core_type = #tpu.core_type<tc>, window_params = [{transform_indices = @transform_0, window_bounds = array<i64: 1>}, {transform_indices = @transform_1, window_bounds = array<i64: 1, 32, 256>}, {pipeline_mode = #tpu.pipeline_mode<synchronous>, transform_indices = @transform_2, window_bounds = array<i64: 12, 32>}, {transform_indices = @transform_3, window_bounds = array<i64: 1, 12, 32>}]} {
    %c0 = arith.constant 0 : index
    %0 = memref.load %arg1[%c0] : memref<1xf32, #tpu.memory_space<smem>>
    %c0_0 = arith.constant 0 : index
    %c0_1 = arith.constant 0 : index
    %1 = vector.load %arg3[%c0_0, %c0_1] : memref<12x32xbf16, #tpu.memory_space<vmem>>, vector<12x32xbf16>
    %c0_2 = arith.constant 0 : index
    %c0_3 = arith.constant 0 : index
    %c0_4 = arith.constant 0 : index
    %2 = vector.load %arg2[%c0_2, %c0_3, %c0_4] : memref<1x32x256xbf16, #tpu.memory_space<vmem>>, vector<1x32x256xbf16>
    %3 = vector.shape_cast %2 : vector<1x32x256xbf16> to vector<32x256xbf16>
    %cst = arith.constant dense<0.000000e+00> : vector<12x256xf32>
    %4 = tpu.matmul %1, %3, %cst {dimension_numbers = #tpu.dot_dimension_numbers<[1], [0], [0], [1], [0, 0, 1, 1], [], []>} : vector<12x32xbf16>, vector<32x256xbf16>, vector<12x256xf32> -> vector<12x256xf32>
    %cst_5 = arith.constant dense<0xFF800000> : vector<12xf32>
    %5 = vector.multi_reduction <maximumf>, %4, %cst_5 [1] : vector<12x256xf32> to vector<12xf32>
    %6 = vector.shape_cast %5 : vector<12xf32> to vector<12x1xf32>
    %7 = vector.broadcast %6 : vector<12x1xf32> to vector<12x256xf32>
    %8 = arith.subf %4, %7 : vector<12x256xf32>
    %9 = math.exp %8 : vector<12x256xf32>
    %cst_6 = arith.constant dense<0.000000e+00> : vector<12xf32>
    %10 = vector.multi_reduction <add>, %9, %cst_6 [1] : vector<12x256xf32> to vector<12xf32>
    %11 = vector.shape_cast %10 : vector<12xf32> to vector<12x1xf32>
    %12 = tpu.reciprocal %11 {approx = true} : vector<12x1xf32> -> vector<12x1xf32>
    %13 = vector.broadcast %0 : f32 to vector<12x1xf32>
    %14 = arith.mulf %13, %12 : vector<12x1xf32>
    %15 = vector.broadcast %14 : vector<12x1xf32> to vector<12x256xf32>
    %16 = arith.mulf %15, %9 : vector<12x256xf32>
    %17 = arith.truncf %16 : vector<12x256xf32> to vector<12x256xbf16>
    %cst_7 = arith.constant dense<0.000000e+00> : vector<12x32xf32>
    %18 = tpu.matmul %17, %3, %cst_7 {dimension_numbers = #tpu.dot_dimension_numbers<[1], [1], [0], [0], [0, 0, 1, 0], [], []>} : vector<12x256xbf16>, vector<32x256xbf16>, vector<12x32xf32> -> vector<12x32xf32>
    %19 = arith.extf %3 : vector<32x256xbf16> to vector<32x256xf32>
    %cst_8 = arith.constant dense<0.000000e+00> : vector<32xf32>
    %20 = vector.multi_reduction <add>, %19, %cst_8 [1] : vector<32x256xf32> to vector<32xf32>
    %cst_9 = arith.constant 3.906250e-03 : f32
    %21 = vector.broadcast %cst_9 : f32 to vector<32xf32>
    %22 = arith.mulf %20, %21 : vector<32xf32>
    %23 = vector.shape_cast %22 : vector<32xf32> to vector<1x32xf32>
    %24 = vector.broadcast %23 : vector<1x32xf32> to vector<12x32xf32>
    %25 = arith.addf %18, %24 : vector<12x32xf32>
    %c0_10 = arith.constant 0 : index
    %c0_11 = arith.constant 0 : index
    %c0_12 = arith.constant 0 : index
    %26 = vector.load %arg4[%c0_10, %c0_11, %c0_12] : memref<1x12x32xf32, #tpu.memory_space<vmem>>, vector<1x12x32xf32>
    %27 = vector.shape_cast %26 : vector<1x12x32xf32> to vector<12x32xf32>
    %28 = vector.shape_cast %25 : vector<12x32xf32> to vector<1x12x32xf32>
    tpu.vector_store %arg4[%c0_10, %c0_11, %c0_12], %28 {strides = array<i32>} : memref<1x12x32xf32, #tpu.memory_space<vmem>>, vector<1x12x32xf32>,
    return
  }
  func.func @transform_0(%arg0: i32) -> i32 {
    %c0_i32 = arith.constant 0 : i32
    %c0_i32_0 = arith.constant 0 : i32
    return %c0_i32 : i32
  }
  func.func @transform_1(%arg0: i32) -> (i32, i32, i32) {
    %c0_i32 = arith.constant 0 : i32
    %c0_i32_0 = arith.constant 0 : i32
    %c0_i32_1 = arith.constant 0 : i32
    return %arg0, %c0_i32, %c0_i32_0 : i32, i32, i32
  }
  func.func @transform_2(%arg0: i32) -> (i32, i32) {
    %c0_i32 = arith.constant 0 : i32
    %c0_i32_0 = arith.constant 0 : i32
    %c0_i32_1 = arith.constant 0 : i32
    return %c0_i32, %c0_i32_0 : i32, i32
  }
  func.func @transform_3(%arg0: i32) -> (i32, i32, i32) {
    %c0_i32 = arith.constant 0 : i32
    %c0_i32_0 = arith.constant 0 : i32
    %c0_i32_1 = arith.constant 0 : i32
    return %arg0, %c0_i32, %c0_i32_0 : i32, i32, i32
  }
}

</mosaic_0001>

<llo_original>
// kernel: tpu_custom_call.1
$region0: #{tpu_custom_call.1}
  #allocation0 [shape = 'u32[]', space=smem, size = 0x4, offset = 0x4, fixed_abs, tag = 'smem constant byte address 0x4 - core index']
  #allocation1 [shape = 'u32[144,128]{1,0:T(1,128)}', space=vmem, size = 0x12000, scoped, tag = 'internal scratch']
  #allocation2 [shape = 'f32[1]{0:T(128)S(6)}', space=smem, size = 0x200, scoped, tag = 'scoped memory for tpu_custom_call.1']
  %s0 = inlined_call_operand.<no memory space> [shape: f32[1], index: 0, kind: input, shape index: {}]
  %s1 = inlined_call_operand.hbm [shape: bf16[2,32,256], index: 1, kind: input, shape index: {}]
  %s2 = inlined_call_operand.hbm [shape: bf16[12,32], index: 2, kind: input, shape index: {}]
  %s3 = inlined_call_operand.vmem [shape: f32[2,12,32], index: 3, kind: output, shape index: {}]
  %s4 = sld [smem:[#allocation0]]
  $region53: #{tpu_custom_call.1} parent=0
    _
  %s6 = ssub.s32 1, %s4
  %s7 = scalar_select 0, %s6, %s4
  %8 = sst [smem:[#allocation2]] %s0
  $region1: #{tpu_custom_call.1} parent=0
    #allocation3 [shape = 'u8[32768]{0}', space=vmem, size = 0x8000, scoped, tag = 'input window, operand 1']
    #allocation4 [shape = 's32[2]{0}', space=sflag, size = 0x8, scoped, tag = 'scoped memory for tpu_custom_call.1']
    #allocation5 [shape = 'u8[4096]{0}', space=vmem, size = 0x1000, scoped, tag = 'input window, operand 2, single buffered']
    #allocation6 [shape = 's32[1]{0}', space=sflag, size = 0x4, scoped, tag = 'scoped memory for tpu_custom_call.1']
    %9 = vsyncpa [#allocation4], 0
    %s10 = scalar_lea.sflag [#allocation4], 1
    %11 = vsyncpa %s10, 0
    %12 = vsyncpa [#allocation6], 0
    loop: start=0, step=1, limit=4
    $region2: #{tpu_custom_call.1} parent=1 // loop_pre_header
      _
    $region3: #{tpu_custom_call.1} parent=1 // loop_header
      %s14 = sphi 0, %s18
      %p15 = scmp.ge.s32.totalorder %s14, 4
      %s22 = sphi 0, %s22
      %s24 = sphi 0, %s22
      %s25 = sphi 0, %s24
      %s39 = sphi 0, %s25
      %s45 = sphi 0, %s47
      %s48 = sphi 0, %s45
      %s49 = sphi 0, %s48
      %s65 = sphi 0, %s49
      %s69 = sphi 0, %s69
      %s71 = sphi 0, %s69
      %s72 = sphi 0, %s71
      %s86 = sphi 0, %s72
      %s92 = sphi 0, %s94
      %s95 = sphi 0, %s92
      %s96 = sphi 0, %s95
      %s112 = sphi 0, %s96
    $region4: #{tpu_custom_call.1} parent=1 // loop_header_branch
      %17 = sbr.rel (%p15) target = $region8
    $region5: #{tpu_custom_call.1} parent=1 // loop_body
      %s19 = ssub.s32 %s14, 1
      %s20 = ssub.s32 %s14, 2
      %s21 = sadd.s32 %s14, 1
      %s23 = sadd.s32 %s22, 1
      %p26 = scmp.eq.s32.totalorder %s14, 1
      %p27 = scmp.ne.s32.totalorder %s22, %s24
      %p28 = scmp.eq.s32.totalorder %s14, 0
      %p29 = por %p27, %p28
      %p30 = scmp.ne.s32.totalorder %s22, %s24
      %p31 = scmp.eq.s32.totalorder %s19, 1
      %p32 = por %p30, %p31
      %p33 = scmp.ne.s32.totalorder %s24, %s25
      %p34 = scmp.eq.s32.totalorder %s19, 0
      %p35 = por %p33, %p34
      %p36 = scmp.ne.s32.totalorder %s24, %s25
      %p37 = scmp.eq.s32.totalorder %s20, 1
      %p38 = por %p36, %p37
      %p40 = scmp.ne.s32.totalorder %s25, %s39
      %p41 = scmp.eq.s32.totalorder %s20, 0
      %p42 = por %p40, %p41
      %s43 = ssub.s32 %s14, %s21
      %p44 = scmp.eq.s32.totalorder %s43, 0
      %s46 = sadd.s32 %s45, 1
      %s47 = scalar_select %p44, %s45, %s46
      %p50 = pneg %p44
      %p51 = scmp.eq.s32.totalorder %s14, 1
      %p52 = por %p50, %p51
      %p53 = scmp.ne.s32.totalorder %s45, %s48
      %p54 = scmp.eq.s32.totalorder %s14, 0
      %p55 = por %p53, %p54
      %p56 = scmp.ne.s32.totalorder %s45, %s48
      %p57 = scmp.eq.s32.totalorder %s19, 1
      %p58 = por %p56, %p57
      %p59 = scmp.ne.s32.totalorder %s48, %s49
      %p60 = scmp.eq.s32.totalorder %s19, 0
      %p61 = por %p59, %p60
      %p62 = scmp.ne.s32.totalorder %s48, %s49
      %p63 = scmp.eq.s32.totalorder %s20, 1
      %p64 = por %p62, %p63
      %p66 = scmp.ne.s32.totalorder %s49, %s65
      %p67 = scmp.eq.s32.totalorder %s20, 0
      %p68 = por %p66, %p67
      %s70 = sadd.s32 %s69, 1
      %p73 = scmp.eq.s32.totalorder %s14, 1
      %p74 = scmp.ne.s32.totalorder %s69, %s71
      %p75 = scmp.eq.s32.totalorder %s14, 0
      %p76 = por %p74, %p75
      %p77 = scmp.ne.s32.totalorder %s69, %s71
      %p78 = scmp.eq.s32.totalorder %s19, 1
      %p79 = por %p77, %p78
      %p80 = scmp.ne.s32.totalorder %s71, %s72
      %p81 = scmp.eq.s32.totalorder %s19, 0
      %p82 = por %p80, %p81
      %p83 = scmp.ne.s32.totalorder %s71, %s72
      %p84 = scmp.eq.s32.totalorder %s20, 1
      %p85 = por %p83, %p84
      %p87 = scmp.ne.s32.totalorder %s72, %s86
      %p88 = scmp.eq.s32.totalorder %s20, 0
      %p89 = por %p87, %p88
      %s90 = ssub.s32 %s14, %s21
      %p91 = scmp.eq.s32.totalorder %s90, 0
      %s93 = sadd.s32 %s92, 1
      %s94 = scalar_select %p91, %s92, %s93
      %p97 = pneg %p91
      %p98 = scmp.eq.s32.totalorder %s14, 1
      %p99 = por %p97, %p98
      %p100 = scmp.ne.s32.totalorder %s92, %s95
      %p101 = scmp.eq.s32.totalorder %s14, 0
      %p102 = por %p100, %p101
      %p103 = scmp.ne.s32.totalorder %s92, %s95
      %p104 = scmp.eq.s32.totalorder %s19, 1
      %p105 = por %p103, %p104
      %p106 = scmp.ne.s32.totalorder %s95, %s96
      %p107 = scmp.eq.s32.totalorder %s19, 0
      %p108 = por %p106, %p107
      %p109 = scmp.ne.s32.totalorder %s95, %s96
      %p110 = scmp.eq.s32.totalorder %s20, 1
      %p111 = por %p109, %p110
      %p113 = scmp.ne.s32.totalorder %s96, %s112
      %p114 = scmp.eq.s32.totalorder %s20, 0
      %p115 = por %p113, %p114
      %p116 = scmp.le.s32.totalorder 1, %s14
      %p117 = scmp.lt.s32.totalorder %s14, 3
      %p118 = pnand %p116, %p117
      %p119 = pneg %p118
      // Predicated region
      $region9: #{tpu_custom_call.1} parent=5 // pred_check
        _
      $region10: #{tpu_custom_call.1} parent=5 // pred_check_branch
        %121 = sbr.rel (%p118) target = $region12
      $region11: #{tpu_custom_call.1} parent=5 // pred_region
        %s122 = ssub.s32 %s14, 1
        // Predicated region
        $region13: #{tpu_custom_call.1} parent=11 // pred_check
          %p123 = pneg %p35
        $region14: #{tpu_custom_call.1} parent=11 // pred_check_branch
          %125 = sbr.rel (%p123) target = $region16
        $region15: #{tpu_custom_call.1} parent=11 // pred_region
          _
        $region16: #{tpu_custom_call.1} parent=11 // pred_fallthru
          _
        // Predicated region
        $region17: #{tpu_custom_call.1} parent=11 // pred_check
          %p126 = pneg %p82
        $region18: #{tpu_custom_call.1} parent=11 // pred_check_branch
          %128 = sbr.rel (%p126) target = $region20
        $region19: #{tpu_custom_call.1} parent=11 // pred_region
          %s130 = ssub.s32 128, 128
          %131 = vsyncadd [#allocation6], %s130
          %s132 = sshll.u32 [#allocation5], 4
          %s133 = int_to_ptr.vmem [resolvable:$true] %s132
          %138 = dma.hbm_to_vmem [thread:$0]  %s2, 128, %s133, [#allocation6], 64, 64, 4
        $region20: #{tpu_custom_call.1} parent=11 // pred_fallthru
          _
      $region12: #{tpu_custom_call.1} parent=5 // pred_fallthru
        _
      %p139 = scmp.lt.s32.totalorder %s14, 2
      // Predicated region
      $region21: #{tpu_custom_call.1} parent=5 // pred_check
        %p140 = pneg %p139
      $region22: #{tpu_custom_call.1} parent=5 // pred_check_branch
        %142 = sbr.rel (%p140) target = $region24
      $region23: #{tpu_custom_call.1} parent=5 // pred_region
        // Predicated region
        $region25: #{tpu_custom_call.1} parent=23 // pred_check
          %p143 = pneg %p55
        $region26: #{tpu_custom_call.1} parent=23 // pred_check_branch
          %145 = sbr.rel (%p143) target = $region28
        $region27: #{tpu_custom_call.1} parent=23 // pred_region
          %s146 = sand.u32 %s45, 1
          %s147 = scalar_lea.sflag [#allocation4], %s146
          %s148 = sand.u32 %s45, 1
          %s149 = smul.addr %s148, 32
          %s150 = scalar_lea.vmem [#allocation3], %s149
          %s152 = ssub.s32 512, 512
          %153 = vsyncadd %s147, %s152
          %s154 = smul.addr %s14, 8
          %s155 = smul.addr %s154, 64
          %s156 = scalar_lea.hbm %s1, %s155
          %s157 = sshll.u32 %s150, 4
          %s158 = int_to_ptr.vmem [resolvable:$true] %s157
          %163 = dma.hbm_to_vmem [thread:$0]  %s156, 512, %s158, %s147, 128, 128, 8
        $region28: #{tpu_custom_call.1} parent=23 // pred_fallthru
          _
      $region24: #{tpu_custom_call.1} parent=5 // pred_fallthru
        _
      %p164 = scmp.le.s32.totalorder 1, %s14
      %p165 = scmp.lt.s32.totalorder %s14, 3
      %p166 = pnand %p164, %p165
      %p167 = pneg %p166
      // Predicated region
      $region29: #{tpu_custom_call.1} parent=5 // pred_check
        _
      $region30: #{tpu_custom_call.1} parent=5 // pred_check_branch
        %169 = sbr.rel (%p166) target = $region32
      $region31: #{tpu_custom_call.1} parent=5 // pred_region
        %s170 = ssub.s32 %s14, 1
        %s171 = sand.u32 %s48, 1
        %s172 = scalar_lea.sflag [#allocation4], %s171
        %s173 = sand.u32 %s48, 1
        %s174 = smul.addr %s173, 32
        %s175 = scalar_lea.vmem [#allocation3], %s174
        // Predicated region
        $region33: #{tpu_custom_call.1} parent=31 // pred_check
          %p176 = pneg %p61
        $region34: #{tpu_custom_call.1} parent=31 // pred_check_branch
          %178 = sbr.rel (%p176) target = $region36
        $region35: #{tpu_custom_call.1} parent=31 // pred_region
          %179 = dma.done %s172, 512
        $region36: #{tpu_custom_call.1} parent=31 // pred_fallthru
          _
        // Predicated region
        $region37: #{tpu_custom_call.1} parent=31 // pred_check
          %p180 = pneg %p82
        $region38: #{tpu_custom_call.1} parent=31 // pred_check_branch
          %182 = sbr.rel (%p180) target = $region40
        $region39: #{tpu_custom_call.1} parent=31 // pred_region
          %183 = dma.done [#allocation6], 128
        $region40: #{tpu_custom_call.1} parent=31 // pred_fallthru
          _
        %p184 = pneg %p35
        %p185 = pneg %p32
        %s186 = sand.u32 %s48, 1
        %s187 = scalar_lea.sflag [#allocation4], %s186
        %s188 = sand.u32 %s48, 1
        %s189 = smul.addr %s188, 32
        %s190 = scalar_lea.vmem [#allocation3], %s189
        %p191 = pneg %p61
        %p192 = pneg %p58
        %p193 = pneg %p82
        %p194 = pneg %p79
        %p195 = pneg %p108
        %p196 = pneg %p105
        %p197 = scmp.lt.s32.totalorder %s19, 1
        %s198 = scalar_select %p197, %s19, 1
        %s199 = smul.addr %s198, 2
        %s200 = smul.addr %s199, 8
        %s201 = scalar_lea.vmem %s3, %s200
        %p202 = scmp.lt.s32.totalorder %s19, 1
        %s203 = scalar_select %p202, %s19, 1
        %s204 = smul.addr %s203, 2
        %s205 = smul.addr %s204, 8
        %s206 = scalar_lea.vmem %s3, %s205
        %s208 = sld [smem:[#allocation2]]
        %v209 = vld [vmem:[#allocation5] sm:$0xf]
        %v210 = vld [vmem:[#allocation5 + $0x4] sm:$0x3]
        %v211 = vld [vmem:[%s175] sm:$0xff]
        %v212 = vld [vmem:[%s175 + $0x8] sm:$0xff]
        %v213 = vld [vmem:[%s175 + $0x10] sm:$0xff]
        %v214 = vld [vmem:[%s175 + $0x18] sm:$0xff]
        %v217 = vunpack.c.l.b16 %v209
        %v218 = vunpack.c.l.b16 %v210
        %v219 = vpack.c.b16 %v218, %v217
        %v224 = vunpack.c.l.b16 %v211
        %v225 = vunpack.c.h.b16 %v211
        %v226 = vunpack.c.l.b16 %v212
        %v227 = vunpack.c.h.b16 %v212
        %v228 = vunpack.c.l.b16 %v213
        %v229 = vunpack.c.h.b16 %v213
        %v230 = vunpack.c.l.b16 %v214
        %v231 = vunpack.c.h.b16 %v214
        %v232 = vpack.c.b16 %v226, %v224
        %v233 = vpack.c.b16 %v227, %v225
        %v234 = vpack.c.b16 %v230, %v228
        %v235 = vpack.c.b16 %v231, %v229
        %vm240 = vcmask 261120
        %v242 = vsel %vm240, %v219, 0
        %244 = vmatprep.subr.bf16.mxu0 %v233
        %245 = vmatpush1.bf16.msra.mxu0 %v232
        %246 = vmatprep.subr.bf16.mxu0 %v235
        %247 = vmatpush1.bf16.msra.mxu0 %v234
        %248 = vmatprep.subr.bf16.mxu0 0
        %249 = vmatpush1.bf16.msra.mxu0 0
        %250 = vmatprep.subr.bf16.mxu0 0
        %251 = vmatpush1.bf16.msra.mxu0 0
        %252 = vmatprep.subr.bf16.mxu0 0
        %253 = vmatpush1.bf16.msra.mxu0 0
        %254 = vmatprep.subr.bf16.mxu0 0
        %255 = vmatpush1.bf16.msra.mxu0 0
        %256 = vmatprep.subr.bf16.mxu0 0
        %257 = vmatpush1.bf16.msra.mxu0 0
        %258 = vmatprep.subr.bf16.mxu0 0
        %259 = vmatpush1.bf16.msra.mxu0 0
        %260 = vmatprep.subr.bf16.mxu0 0
        %261 = vmatpush1.bf16.msra.mxu0 0
        %262 = vmatprep.subr.bf16.mxu0 0
        %263 = vmatpush1.bf16.msra.mxu0 0
        %264 = vmatprep.subr.bf16.mxu0 0
        %265 = vmatpush1.bf16.msra.mxu0 0
        %266 = vmatprep.subr.bf16.mxu0 0
        %267 = vmatpush1.bf16.msra.mxu0 0
        %268 = vmatprep.subr.bf16.mxu0 0
        %269 = vmatpush1.bf16.msra.mxu0 0
        %270 = vmatprep.subr.bf16.mxu0 0
        %271 = vmatpush1.bf16.msra.mxu0 0
        %272 = vmatprep.subr.bf16.mxu0 0
        %273 = vmatpush1.bf16.msra.mxu0 0
        %274 = vmatprep.subr.bf16.mxu0 0
        %275 = vmatpush1.bf16.msra.mxu0 0
        %276 = vmatprep.mubr.bf16.mxu0 0
        %277 = vmatmul.mubr.bf16.gmra.mrb[0].mxu0 %v242
        %v278 = vpop.f32.mrb[0].mxu0
        %v279 = vadd.f32 0.0, %v278
        %v280 = vpop.f32.mrb[0].mxu0
        %v281 = vadd.f32 0.0, %v280
        %v282 = vpop.f32.mrb[0].mxu0
        %v283 = vadd.f32 0.0, %v282
        %v284 = vpop.f32.mrb[0].mxu0
        %v285 = vadd.f32 0.0, %v284
        %286 = vdwg.mxu0
        %v287 = vmax.f32 %v279, %v281
        %288 = vmax.xlane.f32.xlu0 %v287
        %v289 = vpop.xlane.xlu0 %288
        %vm290 = vcmask 1043456
        %v291 = vsel %vm290, %v283, -inf
        %v292 = vsel %vm290, %v285, -inf
        %v293 = vmax.f32 %v291, %v292
        %294 = vmax.xlane.f32.xlu0 %v293
        %v295 = vpop.xlane.xlu0 %294
        %v296 = vsub.f32 %v279, %v289
        %v297 = vsub.f32 %v281, %v289
        %v298 = vsub.f32 %v283, %v295
        %v299 = vsub.f32 %v285, %v295
        %v300 = vmul.f32 %v296, 1.442695
        %v301 = vpow.pop %v300
        %v302 = vmul.f32 %v297, 1.442695
        %v303 = vpow.pop %v302
        %v304 = vmul.f32 %v298, 1.442695
        %v305 = vpow.pop %v304
        %v306 = vmul.f32 %v299, 1.442695
        %v307 = vpow.pop %v306
        %v308 = vadd.f32 %v301, %v303
        %309 = vadd.xlane.f32.xlu0 %v308
        %v310 = vpop.xlane.xlu0 %309
        %v311 = vsel %vm290, %v305, 0.0
        %v312 = vsel %vm290, %v307, 0.0
        %v313 = vadd.f32 %v311, %v312
        %314 = vadd.xlane.f32.xlu0 %v313
        %v315 = vpop.xlane.xlu0 %314
        %v316 = vrcp.pop %v310
        %v317 = vrcp.pop %v315
        %v318 = vstv %s208
        %v319 = vmul.f32 %v318, %v316
        %v320 = vmul.f32 %v318, %v317
        %v321 = vmul.f32 %v319, %v301
        %v322 = vmul.f32 %v319, %v303
        %v323 = vmul.f32 %v320, %v305
        %v324 = vmul.f32 %v320, %v307
        %v325 = vpack.c.bf16 %v323, %v321
        %v326 = vpack.c.bf16 %v324, %v322
        %v327 = vunpack.c.l.bf16 %v211
        %v328 = vunpack.c.h.bf16 %v211
        %v329 = vunpack.c.l.bf16 %v212
        %v330 = vunpack.c.h.bf16 %v212
        %v331 = vunpack.c.l.bf16 %v213
        %v332 = vunpack.c.h.bf16 %v213
        %v333 = vunpack.c.l.bf16 %v214
        %v334 = vunpack.c.h.bf16 %v214
        %v335 = vadd.f32 %v327, %v328
        %336 = vadd.xlane.f32.xlu0 %v335
        %v337 = vpop.xlane.xlu0 %336
        %v338 = vadd.f32 %v329, %v330
        %339 = vadd.xlane.f32.xlu0 %v338
        %v340 = vpop.xlane.xlu0 %339
        %v341 = vadd.f32 %v331, %v332
        %342 = vadd.xlane.f32.xlu0 %v341
        %v343 = vpop.xlane.xlu0 %342
        %v344 = vadd.f32 %v333, %v334
        %345 = vadd.xlane.f32.xlu0 %v344
        %v346 = vpop.xlane.xlu0 %345
        %v347 = vmul.f32 %v337, 0.00390625
        %v348 = vmul.f32 %v340, 0.00390625
        %v349 = vmul.f32 %v343, 0.00390625
        %v350 = vmul.f32 %v346, 0.00390625
        %v355 = vlaneseq
        %v356 = vand.u32 %v355, 127
        %v357 = vlaneseq
        %v358 = vshrl.u32 %v357, 7
        %v359 = vsub.s32 %v356, %v358
        %v360 = vrot.slane %v347, %v359
        %v361 = vadd.s32 %v356, 4294967288
        %v362 = vlaneseq
        %v363 = vshrl.u32 %v362, 7
        %v364 = vsub.s32 %v361, %v363
        %v365 = vrot.slane %v348, %v364
        %vm366 = vcmask 130112
        %v367 = vsel %vm366, %v365, %v360
        %v368 = vadd.s32 %v356, 4294967280
        %v369 = vlaneseq
        %v370 = vshrl.u32 %v369, 7
        %v371 = vsub.s32 %v368, %v370
        %v372 = vrot.slane %v349, %v371
        %vm373 = vcmask 195712
        %v374 = vsel %vm373, %v372, %v367
        %v375 = vadd.s32 %v356, 4294967272
        %v376 = vlaneseq
        %v377 = vshrl.u32 %v376, 7
        %v378 = vsub.s32 %v375, %v377
        %v379 = vrot.slane %v350, %v378
        %vm380 = vcmask 261312
        %v381 = vsel %vm380, %v379, %v374
        %vm382 = vcmask 1042434
        %v383 = vsel %vm382, %v381, %v381
        %vm384 = vcmask 1043459
        %v385 = vsel %vm384, %v381, %v383
        %vm386 = vcmask 1044484
        %v387 = vsel %vm386, %v381, %v385
        %vm388 = vcmask 1045509
        %v389 = vsel %vm388, %v381, %v387
        %vm390 = vcmask 1046534
        %v391 = vsel %vm390, %v381, %v389
        %vm392 = vcmask 1047559
        %v393 = vsel %vm392, %v381, %v391
        %396 = vmatprep.subr.bf16.mxu0 %v233
        %397 = vmatpush1.bf16.xpose.msra.mxu0 %v232
        %398 = vmatprep.subr.bf16.mxu0 %v235
        %399 = vmatpush1.bf16.xpose.msra.mxu0 %v234
        %400 = vmatprep.subr.bf16.mxu0 0
        %401 = vmatpush1.bf16.xpose.msra.mxu0 0
        %402 = vmatprep.subr.bf16.mxu0 0
        %403 = vmatpush1.bf16.xpose.msra.mxu0 0
        %404 = vmatprep.subr.bf16.mxu0 0
        %405 = vmatpush1.bf16.xpose.msra.mxu0 0
        %406 = vmatprep.subr.bf16.mxu0 0
        %407 = vmatpush1.bf16.xpose.msra.mxu0 0
        %408 = vmatprep.subr.bf16.mxu0 0
        %409 = vmatpush1.bf16.xpose.msra.mxu0 0
        %410 = vmatprep.subr.bf16.mxu0 0
        %411 = vmatpush1.bf16.xpose.msra.mxu0 0
        %412 = vmatprep.subr.bf16.mxu0 0
        %413 = vmatpush1.bf16.xpose.msra.mxu0 0
        %414 = vmatprep.subr.bf16.mxu0 0
        %415 = vmatpush1.bf16.xpose.msra.mxu0 0
        %416 = vmatprep.subr.bf16.mxu0 0
        %417 = vmatpush1.bf16.xpose.msra.mxu0 0
        %418 = vmatprep.subr.bf16.mxu0 0
        %419 = vmatpush1.bf16.xpose.msra.mxu0 0
        %420 = vmatprep.subr.bf16.mxu0 0
        %421 = vmatpush1.bf16.xpose.msra.mxu0 0
        %422 = vmatprep.subr.bf16.mxu0 0
        %423 = vmatpush1.bf16.xpose.msra.mxu0 0
        %424 = vmatprep.subr.bf16.mxu0 0
        %425 = vmatpush1.bf16.xpose.msra.mxu0 0
        %426 = vmatprep.subr.bf16.mxu0 0
        %427 = vmatpush1.bf16.xpose.msra.mxu0 0
        %428 = vmatprep.mubr.bf16.mxu0 %v326
        %429 = vmatmul.mubr.bf16.gmra.mrb[0].mxu0 %v325
        %v430 = vpop.f32.mrb[0].mxu0
        %v431 = vadd.f32 %v393, %v430
        %v432 = vpop.f32.mrb[0].mxu0
        %v433 = vpop.f32.mrb[0].mxu0
        %v434 = vadd.f32 %v385, %v433
        %v435 = vpop.f32.mrb[0].mxu0
        %436 = vdwg.mxu0
        %437 = vst.msk [vmem:[%s206] sm:$0xff] %vm240, %v431
        %vm438 = vcmask 257024
        %439 = vst.msk [vmem:[%s206 + $0x8] sm:$0xf] %vm438, %v434
        %p440 = scmp.lt.s32.totalorder %s19, 1
        %s441 = scalar_select %p440, %s19, 1
        %s442 = smul.addr %s441, 2
        %s443 = smul.addr %s442, 8
        %s444 = scalar_lea.vmem %s3, %s443
        // Predicated region
        $region41: #{tpu_custom_call.1} parent=31 // pred_check
          %p445 = pneg %p105
        $region42: #{tpu_custom_call.1} parent=31 // pred_check_branch
          %447 = sbr.rel (%p445) target = $region44
        $region43: #{tpu_custom_call.1} parent=31 // pred_region
          _
        $region44: #{tpu_custom_call.1} parent=31 // pred_fallthru
          _
      $region32: #{tpu_custom_call.1} parent=5 // pred_fallthru
        _
      %p448 = scmp.le.s32.totalorder 2, %s14
      // Predicated region
      $region45: #{tpu_custom_call.1} parent=5 // pred_check
        %p449 = pneg %p448
      $region46: #{tpu_custom_call.1} parent=5 // pred_check_branch
        %451 = sbr.rel (%p449) target = $region48
      $region47: #{tpu_custom_call.1} parent=5 // pred_region
        %s452 = ssub.s32 %s14, 2
        // Predicated region
        $region49: #{tpu_custom_call.1} parent=47 // pred_check
          %p453 = pneg %p111
        $region50: #{tpu_custom_call.1} parent=47 // pred_check_branch
          %455 = sbr.rel (%p453) target = $region52
        $region51: #{tpu_custom_call.1} parent=47 // pred_region
          %p456 = scmp.lt.s32.totalorder %s20, 1
          %s457 = scalar_select %p456, %s20, 1
          %s458 = smul.addr %s457, 2
          %s459 = smul.addr %s458, 8
          %s460 = scalar_lea.vmem %s3, %s459
        $region52: #{tpu_custom_call.1} parent=47 // pred_fallthru
          _
      $region48: #{tpu_custom_call.1} parent=5 // pred_fallthru
        _
    $region6: #{tpu_custom_call.1} parent=1 // loop_footer
      %s18 = sadd.s32 1, %s14
    $region7: #{tpu_custom_call.1} parent=1 // loop_footer_branch
      %13 = sbr.rel target = $region3
    $region8: #{tpu_custom_call.1} parent=1 // loop_exit
      _
    %461 = vsyncpa [#allocation4], 1
    %s462 = scalar_lea.sflag [#allocation4], 1
    %463 = vsyncpa %s462, 1
    %464 = vsyncpa [#allocation6], 1

</llo_original>
